<compile_context>
chip_gen: v5e
topology: v5e:2x2
jax: 0.10.0
libtpu: 0.0.40
codegen_flags: <defaults>
</compile_context>

<pallas_src>
import jax
import jax.numpy as jnp
from jax.experimental import pallas as pl
from jax.experimental.pallas import tpu as pltpu


def _pool_kernel(x_ref, mask_ref, w_ref, o_ref):
    # x_ref    : (Bt, S, H) block  -> tile of batch elements
    # mask_ref : (Bt, S)    block  (int32, lane-dense over S)
    # w_ref    : (1, H)     block  (Linear weight row, constant across the grid)
    # o_ref    : (Bt, H)    block
    x = x_ref[...]                                   # (Bt, S, H)
    m = mask_ref[...]                                # (Bt, S)
    w = w_ref[...]                                   # (1, H)

    # attention scores on the VPU/XLU: scores[b, s] = sum_h x[b, s, h] * w[h]
    # (elementwise multiply + one lane-reduce; f32 accumulation)
    scores = jnp.sum(x * w, axis=-1, dtype=jnp.float32)          # (Bt, S)

    # mask out padded positions with f32 min (matches torch.finfo(...).min)
    neg_min = jnp.finfo(jnp.float32).min
    scores = jnp.where(m == 0, neg_min, scores)                  # (Bt, S)

    # lane-dense softmax over the sequence axis; normalization is deferred
    s_max = jnp.max(scores, axis=-1, keepdims=True)              # (Bt, 1)
    e = jnp.exp(scores - s_max)                                  # (Bt, S)
    denom = jnp.sum(e, axis=-1, keepdims=True)                   # (Bt, 1)

    # weighted sum over S on the VPU (sublane reduce), f32 accumulation:
    #   pooled[b, h] = sum_s e[b, s] * x[b, s, h]
    pooled = jnp.sum(e[:, :, None] * x, axis=1, dtype=jnp.float32)   # (Bt, H)

    # deferred normalization: scale the small (Bt, H) result by 1/denom
    o_ref[...] = (pooled * pl.reciprocal(denom, approx=False)).astype(o_ref.dtype)


def _vmem_capacity_bytes():
    """Physical VMEM of the current TPU generation; conservative fallback (v7x)."""
    default = 64 * 1024 * 1024
    try:
        info = pltpu.get_tpu_info()
        cap = getattr(info, "vmem_capacity_bytes", None)
        return int(cap) if cap else default
    except Exception:
        return default


def _choose_b_tile(B, S, H, itemsize, budget_bytes):
    """Largest sublane-aligned batch tile whose steady-state VMEM footprint fits.

    Per-batch-row footprint (double-buffered pipeline, conservative):
      2 * S*H*itemsize        x block (x2 buffers)
      2 * S*H*4               ~two full-size f32 temporaries (x*w product, e*x product)
      2 * S*4                 mask block (int32, x2 buffers)
      2 * H*itemsize          out block (x2 buffers)
      3 * S*4 + H*4           scores / e / pooled
    """
    per_row = (2 * S * H * itemsize + 2 * S * H * 4
               + 2 * S * 4 + 2 * H * itemsize + 3 * S * 4 + H * 4)
    if B <= 8:
        # tiny batch: single grid step; blocks equal the full array dims (sublane-safe)
        return B
    bt = max(8, budget_bytes // per_row)
    bt = min(bt, B)
    # >= 2 grid steps per TensorCore when B allows (v7x has 2 cores -> aim for >= 4 steps)
    bt = min(bt, max(8, pl.cdiv(B, 4)))
    # keep mask/out blocks sublane-aligned (multiple of 8)
    bt = max(8, (bt // 8) * 8)
    return int(min(bt, B))


def learnable_pooling(x, attention_mask, weight, *, b_tile=None):
    """x: (B, S, H), attention_mask: (B, S), weight: (1, H) -> (B, H)."""
    B, S, H = x.shape
    # lane-dense 2-D mask; int32 keeps the sublane-tile requirement at 8 (int8 tiles
    # would need multiples of 32) and mask traffic is only ~1/H of the x traffic
    mask = attention_mask.astype(jnp.int32)                      # (B, S)
    w2 = weight.astype(x.dtype).reshape(1, H)                    # Linear(H, 1) weight row

    vmem_cap = _vmem_capacity_bytes()
    # steady-state budget ~3/8 of physical VMEM; compiler limit ~1/2 (capped at 64 MiB)
    # -> ~24 / 32 MiB on v7x (64 MiB VMEM), ~48 / 64 MiB on v5e / v6e (128 MiB VMEM)
    budget = (vmem_cap * 3) // 8
    vmem_limit = int(min(vmem_cap // 2, 64 * 1024 * 1024))

    if b_tile is None:
        b_tile = _choose_b_tile(B, S, H, jnp.dtype(x.dtype).itemsize, budget)
    grid = (pl.cdiv(B, b_tile),)

    # TODO(synk): for very long sequences where one (b_tile, S, H) slab no longer fits
    # VMEM (esp. v7x 64 MiB), add a trailing "arbitrary" grid axis over S-chunks with
    # (m, l, acc) scratch and an online softmax instead of shrinking b_tile toward 1.
    out = pl.pallas_call(
        _pool_kernel,
        out_shape=jax.ShapeDtypeStruct((B, H), x.dtype),
        grid=grid,
        in_specs=[
            pl.BlockSpec((b_tile, S, H), lambda b: (b, 0, 0)),
            pl.BlockSpec((b_tile, S), lambda b: (b, 0)),
            pl.BlockSpec((1, H), lambda b: (0, 0)),
        ],
        out_specs=pl.BlockSpec((b_tile, H), lambda b: (b, 0)),
        compiler_params=pltpu.CompilerParams(
            dimension_semantics=("parallel",),
            vmem_limit_bytes=vmem_limit,
        ),
    )(x, mask, w2)
    return out


def _reference(x, attention_mask, weight):
    # Pure-JAX reference mirroring the PyTorch forward.
    mask_expanded = attention_mask.astype(jnp.float32)[..., None]    # (B, S, 1)
    scores = jnp.einsum("bsh,oh->bso", x, weight)                     # (B, S, 1)
    scores = jnp.where(mask_expanded == 0.0,
                       jnp.finfo(scores.dtype).min, scores)
    weights = jax.nn.softmax(scores, axis=1)
    return jnp.sum(x * weights, axis=1)                               # (B, H)


if __name__ == "__main__":
    key = jax.random.PRNGKey(0)
    kx, kw = jax.random.split(key, 2)

    B, S, H = 2, 8, 32
    x = jax.random.normal(kx, (B, S, H), dtype=jnp.float32)
    # deterministic mask: first few positions valid per batch element
    lengths = jnp.array([6, 4], dtype=jnp.int32)
    attention_mask = (jnp.arange(S)[None, :] < lengths[:, None]).astype(jnp.int32)

    # deterministic Linear(H, 1, bias=False) weight, PyTorch shape (1, H)
    weight = jax.random.normal(kw, (1, H), dtype=jnp.float32) * 0.1

    out = learnable_pooling(x, attention_mask, weight)
    out = jax.block_until_ready(out)

    ref = _reference(x, attention_mask, weight)
    assert out.shape == (B, H)
    assert jnp.allclose(out, ref, atol=2e-5, rtol=2e-5), "mismatch vs reference"

    print("KERNEL_OK")
</pallas_src>

<mosaic_0001>
module attributes {stable_mosaic.version = 11 : i64} {
  func.func @_pool_kernel(%arg0: i32, %arg1: memref<2x8x32xf32, #tpu.memory_space<vmem>>, %arg2: memref<2x8xi32, #tpu.memory_space<vmem>>, %arg3: memref<1x32xf32, #tpu.memory_space<vmem>>, %arg4: memref<2x32xf32, #tpu.memory_space<vmem>>) attributes {dimension_semantics = [#tpu.dimension_semantics<parallel>], iteration_bounds = array<i64: 1>, scalar_prefetch = 0 : i64, scratch_operands = 0 : i64, tpu.core_type = #tpu.core_type<tc>, window_params = [{transform_indices = @transform_0, window_bounds = array<i64: 2, 8, 32>}, {transform_indices = @transform_1, window_bounds = array<i64: 2, 8>}, {pipeline_mode = #tpu.pipeline_mode<synchronous>, transform_indices = @transform_2, window_bounds = array<i64: 1, 32>}, {transform_indices = @transform_3, window_bounds = array<i64: 2, 32>}]} {
    %c0 = arith.constant 0 : index
    %c0_0 = arith.constant 0 : index
    %c0_1 = arith.constant 0 : index
    %0 = vector.load %arg1[%c0, %c0_0, %c0_1] : memref<2x8x32xf32, #tpu.memory_space<vmem>>, vector<2x8x32xf32>
    %c0_2 = arith.constant 0 : index
    %c0_3 = arith.constant 0 : index
    %1 = vector.load %arg2[%c0_2, %c0_3] : memref<2x8xi32, #tpu.memory_space<vmem>>, vector<2x8xi32>
    %c0_4 = arith.constant 0 : index
    %c0_5 = arith.constant 0 : index
    %2 = vector.load %arg3[%c0_4, %c0_5] : memref<1x32xf32, #tpu.memory_space<vmem>>, vector<1x32xf32>
    %3 = vector.shape_cast %2 : vector<1x32xf32> to vector<1x1x32xf32>
    %4 = vector.broadcast %3 : vector<1x1x32xf32> to vector<2x8x32xf32>
    %5 = arith.mulf %0, %4 : vector<2x8x32xf32>
    %cst = arith.constant dense<0.000000e+00> : vector<2x8xf32>
    %6 = vector.multi_reduction <add>, %5, %cst [2] : vector<2x8x32xf32> to vector<2x8xf32>
    %c0_i32 = arith.constant 0 : i32
    %7 = vector.broadcast %c0_i32 : i32 to vector<2x8xi32>
    %8 = arith.cmpi eq, %1, %7 : vector<2x8xi32>
    %cst_6 = arith.constant -3.40282347E+38 : f32
    %9 = vector.broadcast %cst_6 : f32 to vector<2x8xf32>
    %10 = arith.select %8, %9, %6 : vector<2x8xi1>, vector<2x8xf32>
    %cst_7 = arith.constant dense<0xFF800000> : vector<2xf32>
    %11 = vector.multi_reduction <maximumf>, %10, %cst_7 [1] : vector<2x8xf32> to vector<2xf32>
    %12 = vector.shape_cast %11 : vector<2xf32> to vector<2x1xf32>
    %13 = vector.broadcast %12 : vector<2x1xf32> to vector<2x8xf32>
    %14 = arith.subf %10, %13 : vector<2x8xf32>
    %15 = math.exp %14 : vector<2x8xf32>
    %cst_8 = arith.constant dense<0.000000e+00> : vector<2xf32>
    %16 = vector.multi_reduction <add>, %15, %cst_8 [1] : vector<2x8xf32> to vector<2xf32>
    %17 = vector.shape_cast %16 : vector<2xf32> to vector<2x1xf32>
    %18 = vector.shape_cast %15 : vector<2x8xf32> to vector<2x8x1xf32>
    %19 = vector.broadcast %18 : vector<2x8x1xf32> to vector<2x8x32xf32>
    %20 = arith.mulf %19, %0 : vector<2x8x32xf32>
    %cst_9 = arith.constant dense<0.000000e+00> : vector<2x32xf32>
    %21 = vector.multi_reduction <add>, %20, %cst_9 [1] : vector<2x8x32xf32> to vector<2x32xf32>
    %22 = tpu.reciprocal %17 : vector<2x1xf32> -> vector<2x1xf32>
    %23 = vector.broadcast %22 : vector<2x1xf32> to vector<2x32xf32>
    %24 = arith.mulf %21, %23 : vector<2x32xf32>
    %c0_10 = arith.constant 0 : index
    %c0_11 = arith.constant 0 : index
    %25 = vector.load %arg4[%c0_10, %c0_11] : memref<2x32xf32, #tpu.memory_space<vmem>>, vector<2x32xf32>
    tpu.vector_store %arg4[%c0_10, %c0_11], %24 {strides = array<i32>} : memref<2x32xf32, #tpu.memory_space<vmem>>, vector<2x32xf32>,
    return
  }
  func.func @transform_0(%arg0: i32) -> (i32, i32, i32) {
    %c0_i32 = arith.constant 0 : i32
    %c0_i32_0 = arith.constant 0 : i32
    %c0_i32_1 = arith.constant 0 : i32
    return %arg0, %c0_i32, %c0_i32_0 : i32, i32, i32
  }
  func.func @transform_1(%arg0: i32) -> (i32, i32) {
    %c0_i32 = arith.constant 0 : i32
    %c0_i32_0 = arith.constant 0 : i32
    return %arg0, %c0_i32 : i32, i32
  }
  func.func @transform_2(%arg0: i32) -> (i32, i32) {
    %c0_i32 = arith.constant 0 : i32
    %c0_i32_0 = arith.constant 0 : i32
    %c0_i32_1 = arith.constant 0 : i32
    return %c0_i32, %c0_i32_0 : i32, i32
  }
  func.func @transform_3(%arg0: i32) -> (i32, i32) {
    %c0_i32 = arith.constant 0 : i32
    %c0_i32_0 = arith.constant 0 : i32
    return %arg0, %c0_i32 : i32, i32
  }
}

</mosaic_0001>

<llo_original>
// kernel: tpu_custom_call.1
$region0: #{tpu_custom_call.1}
  #allocation0 [shape = 'u32[]', space=smem, size = 0x4, offset = 0x4, fixed_abs, tag = 'smem constant byte address 0x4 - core index']
  #allocation1 [shape = 'u32[72,128]{1,0:T(1,128)}', space=vmem, size = 0x9000, scoped, tag = 'internal scratch']
  %s0 = inlined_call_operand.hbm [shape: f32[2,8,32], index: 0, kind: input, shape index: {}]
  %s1 = inlined_call_operand.hbm [shape: s32[2,8], index: 1, kind: input, shape index: {}]
  %s2 = inlined_call_operand.vmem [shape: f32[1,32], index: 2, kind: input, shape index: {}]
  %s3 = inlined_call_operand.hbm [shape: f32[2,32], index: 3, kind: output, shape index: {}]
  %s4 = sld [smem:[#allocation0]]
  $region30: #{tpu_custom_call.1} parent=0
    _
  %s6 = ssub.s32 1, %s4
  %s7 = scalar_select 0, %s6, %s4
  $region1: #{tpu_custom_call.1} parent=0
    #allocation2 [shape = 'u8[8192]{0}', space=vmem, size = 0x2000, scoped, tag = 'input window, operand 0, single buffered']
    #allocation3 [shape = 's32[1]{0}', space=sflag, size = 0x4, scoped, tag = 'scoped memory for tpu_custom_call.1']
    #allocation4 [shape = 's32[1]{0}', space=sflag, size = 0x4, scoped, tag = 'scoped memory for tpu_custom_call.1']
    #allocation5 [shape = 'u8[1024]{0}', space=vmem, size = 0x400, scoped, tag = 'input window, operand 1, single buffered']
    #allocation6 [shape = 's32[1]{0}', space=sflag, size = 0x4, scoped, tag = 'scoped memory for tpu_custom_call.1']
    #allocation7 [shape = 'u8[1024]{0}', space=vmem, size = 0x400, scoped, tag = 'output window, operand 0, single buffered']
    %8 = vsyncpa [#allocation3], 0
    %9 = vsyncpa [#allocation6], 0
    %10 = vsyncpa [#allocation4], 0
    // Predicated region
    $region2: #{tpu_custom_call.1} parent=1 // pred_check
      _
    $region3: #{tpu_custom_call.1} parent=1 // pred_check_branch
      %12 = sbr.rel (0) target = $region5
    $region4: #{tpu_custom_call.1} parent=1 // pred_region
      %14 = vsyncadd [#allocation3], 0
      %s15 = sshll.u32 %s0, 4
      %s16 = int_to_ptr.hbm [resolvable:$true] %s15
      %s17 = sshll.u32 [#allocation2], 4
      %s18 = int_to_ptr.vmem [resolvable:$true] %s17
      %23 = dma.hbm_to_vmem [thread:$0]  %s16, 256, %s18, [#allocation3], 128, 128, 8
    $region5: #{tpu_custom_call.1} parent=1 // pred_fallthru
      _
    // Predicated region
    $region6: #{tpu_custom_call.1} parent=1 // pred_check
      _
    $region7: #{tpu_custom_call.1} parent=1 // pred_check_branch
      %25 = sbr.rel (0) target = $region9
    $region8: #{tpu_custom_call.1} parent=1 // pred_region
      %27 = vsyncadd [#allocation6], 0
      %s29 = sshll.u32 %s1, 4
      %s30 = int_to_ptr.hbm [resolvable:$true] %s29
      %s31 = sshll.u32 [#allocation5], 4
      %s32 = int_to_ptr.vmem [resolvable:$true] %s31
      %34 = dma.hbm_to_vmem [thread:$0]  %s30, 32, %s32, [#allocation6]
    $region9: #{tpu_custom_call.1} parent=1 // pred_fallthru
      _
    // Predicated region
    $region10: #{tpu_custom_call.1} parent=1 // pred_check
      _
    $region11: #{tpu_custom_call.1} parent=1 // pred_check_branch
      %36 = sbr.rel (0) target = $region13
    $region12: #{tpu_custom_call.1} parent=1 // pred_region
      _
    $region13: #{tpu_custom_call.1} parent=1 // pred_fallthru
      _
    // Predicated region
    $region14: #{tpu_custom_call.1} parent=1 // pred_check
      _
    $region15: #{tpu_custom_call.1} parent=1 // pred_check_branch
      %38 = sbr.rel (0) target = $region17
    $region16: #{tpu_custom_call.1} parent=1 // pred_region
      %40 = dma.done [#allocation3], 256
    $region17: #{tpu_custom_call.1} parent=1 // pred_fallthru
      _
    // Predicated region
    $region18: #{tpu_custom_call.1} parent=1 // pred_check
      _
    $region19: #{tpu_custom_call.1} parent=1 // pred_check_branch
      %42 = sbr.rel (0) target = $region21
    $region20: #{tpu_custom_call.1} parent=1 // pred_region
      %44 = dma.done [#allocation6], 32
    $region21: #{tpu_custom_call.1} parent=1 // pred_fallthru
      _
    %v45 = vld [vmem:[#allocation2] sm:$0xff]
    %v46 = vld [vmem:[#allocation2 + $0x8] sm:$0xff]
    %v47 = vld [vmem:[#allocation5] sm:$0x3]
    %v48 = vld [vmem:[%s2] sm:$0x1]
    %v50 = vperm.slane %v48, 0
    %v52 = vmul.f32 %v45, %v50
    %v53 = vmul.f32 %v46, %v50
    %vm54 = vcmask 261120
    %v55 = vsel %vm54, %v52, 0.0
    %56 = vadd.xlane.f32.xlu0 %v55
    %v57 = vpop.xlane.xlu0 %56
    %v58 = vsel %vm54, %v53, 0.0
    %59 = vadd.xlane.f32.xlu0 %v58
    %v60 = vpop.xlane.xlu0 %59
    %vm61 = vcmp.eq.s32.totalorder %v47, 0
    %v64 = vlaneseq
    %v65 = vand.u32 %v64, 127
    %v66 = vperm.slane %v57, %v65
    %v67 = vperm.slane %v60, %v65
    %vm68 = vcmask 1041409
    %v69 = vsel %vm68, %v67, %v66
    %v71 = vsel %vm61, -3.4028235e+38, %v69
    %vm72 = vcmask 58368
    %v73 = vsel %vm72, %v71, -inf
    %74 = vmax.xlane.f32.xlu0 %v73
    %v75 = vpop.xlane.xlu0 %74
    %v76 = vsub.f32 %v71, %v75
    %v77 = vmul.f32 %v76, 1.442695
    %v78 = vpow.pop %v77
    %v79 = vsel %vm72, %v78, 0.0
    %80 = vadd.xlane.f32.xlu0 %v79
    %v81 = vpop.xlane.xlu0 %80
    %v82 = vperm.slane %v78, 0
    %v83 = vlaneseq
    %v84 = vshrl.u32 %v83, 7
    %86 = vset.pattern.permute.xlu0 %v84
    %87 = vperm.xlu0 %86, %v82
    %v88 = vpop.permute.xlu0 %87
    %v89 = vperm.slane %v78, 1
    %v90 = vlaneseq
    %v91 = vshrl.u32 %v90, 7
    %93 = vset.pattern.permute.xlu0 %v91
    %94 = vperm.xlu0 %93, %v89
    %v95 = vpop.permute.xlu0 %94
    %v96 = vmul.f32 %v88, %v45
    %v97 = vmul.f32 %v95, %v46
    %v98 = vsel %vm54, %v96, 0.0
    %v99 = vrot.slane %v98, 4
    %v100 = vadd.f32 %v98, %v99
    %v101 = vrot.slane %v100, 2
    %v102 = vadd.f32 %v100, %v101
    %v103 = vrot.slane %v102, 1
    %v104 = vadd.f32 %v102, %v103
    %v105 = vsel %vm54, %v97, 0.0
    %v106 = vrot.slane %v105, 4
    %v107 = vadd.f32 %v105, %v106
    %v108 = vrot.slane %v107, 2
    %v109 = vadd.f32 %v107, %v108
    %v110 = vrot.slane %v109, 1
    %v111 = vadd.f32 %v109, %v110
    %v112 = vrcp.pop %v81
    %v113 = vmul.f32 %v81, %v112
    %v114 = vsub.f32 1.0, %v113
    %v115 = vmul.f32 %v112, %v114
    %v116 = vadd.f32 %v112, %v115
    %vm117 = vweird.f32 %v81
    %vm118 = vweird.f32 %v112
    %vm119 = vmor %vm117, %vm118
    %v120 = vsel %vm119, %v112, %v116
    %v121 = vand.u32 2147483647, %v81
    %vm122 = vcmp.eq.f32.partialorder %v121, 8.507059e+37
    %v123 = vand.u32 %v81, 2147483648
    %v124 = vor.u32 1.1754944e-38, %v123
    %v125 = vsel %vm122, %v124, %v120
    %v127 = vrot.slane %v125, 1
    %v130 = vmul.f32 %v104, %v125
    %v131 = vmul.f32 %v111, %v127
    %v134 = vrot.slane %v131, 7
    %v135 = vsel %vm68, %v134, %v130
    %vm137 = vcmask 254976
    %138 = vst.msk [vmem:[#allocation7] sm:$0x3] %vm137, %v135
    // Predicated region
    $region22: #{tpu_custom_call.1} parent=1 // pred_check
      _
    $region23: #{tpu_custom_call.1} parent=1 // pred_check_branch
      %140 = sbr.rel (0) target = $region25
    $region24: #{tpu_custom_call.1} parent=1 // pred_region
      %142 = vsyncadd [#allocation4], 0
      %s144 = sshll.u32 [#allocation7], 4
      %s145 = int_to_ptr.vmem [resolvable:$true] %s144
      %s146 = sshll.u32 %s3, 4
      %s147 = int_to_ptr.hbm [resolvable:$true] %s146
      %149 = dma.vmem_to_hbm [thread:$0]  %s145, 32, %s147, [#allocation4]
    $region25: #{tpu_custom_call.1} parent=1 // pred_fallthru
      _
    // Predicated region
    $region26: #{tpu_custom_call.1} parent=1 // pred_check
      _
    $region27: #{tpu_custom_call.1} parent=1 // pred_check_branch
      %151 = sbr.rel (0) target = $region29
    $region28: #{tpu_custom_call.1} parent=1 // pred_region
      %153 = dma.done [#allocation4], 32
    $region29: #{tpu_custom_call.1} parent=1 // pred_fallthru
      _
    %154 = vsyncpa [#allocation3], 1
    %155 = vsyncpa [#allocation6], 1
    %156 = vsyncpa [#allocation4], 1

</llo_original>
